<compile_context>
chip_gen: v6e
topology: v6e:2x2x1
jax: 0.10.0
libtpu: 0.0.40
codegen_flags: <defaults>
</compile_context>

<pallas_src>
import functools

import jax
import jax.numpy as jnp
from jax.experimental import pallas as pl
from jax.experimental.pallas import tpu as pltpu

_LANE = 128
_SUBLANE = 8


def _round_up(x, m):
    return ((x + m - 1) // m) * m


def _layernorm_kernel(x_ref, gamma_ref, beta_ref, o_ref, *, dim, d_pad, eps):
    # x_ref: (tb, d_pad) block over a (b, dim) array; lanes >= dim (and rows
    # past b in the last block) contain GARBAGE (not zeros) because there is
    # no wrapper padding — both reduction masks below are therefore mandatory
    # whenever d_pad != dim.  gamma_ref / beta_ref: (1, d_pad), already f32.
    x = x_ref[...].astype(jnp.float32)

    if d_pad != dim:
        lane = jax.lax.broadcasted_iota(jnp.int32, x.shape, dimension=1)
        valid = lane < dim
        x_sum_src = jnp.where(valid, x, 0.0)
    else:
        valid = None
        x_sum_src = x

    # Constant-reciprocal multiplies instead of vector divides (dim is static).
    mean = jnp.sum(x_sum_src, axis=-1, keepdims=True) * jnp.float32(1.0 / dim)
    diff = x - mean
    diff_sq = diff * diff
    if valid is not None:
        diff_sq = jnp.where(valid, diff_sq, 0.0)
    # torch.var default is the UNBIASED estimator (divide by dim - 1), matching
    # the reference module (NOT torch.nn.LayerNorm).  dim == 1 -> NaN, same as
    # torch, without a Python-level ZeroDivisionError at trace time.
    inv_den = jnp.float32(1.0 / (dim - 1)) if dim > 1 else jnp.float32(float("nan"))
    var = jnp.sum(diff_sq, axis=-1, keepdims=True) * inv_den
    inv_std = jax.lax.rsqrt(var + jnp.float32(eps))
    x_hat = diff * inv_std
    o_ref[...] = (gamma_ref[...] * x_hat + beta_ref[...]).astype(o_ref.dtype)


def _per_core_vmem_bytes():
    """Best-effort per-TensorCore VMEM capacity (bytes), conservative on doubt.

    v7x has 64 MiB per TensorCore (2 TCs/chip); some queries may report the
    per-chip figure, so unless we can prove a single-core chip we clamp to the
    guaranteed-safe 64 MiB.
    """
    cap = 64 << 20
    try:
        info = pltpu.get_tpu_info()
        c = int(getattr(info, "vmem_capacity_bytes", 0) or 0)
        if c:
            cap = c
        cores = getattr(info, "num_cores", None) or getattr(info, "cores_per_chip", None)
        if cores is None or int(cores) > 1:
            cap = min(cap, 64 << 20)
    except Exception:
        cap = 64 << 20
    return cap


def _pick_block_rows(b, d_pad, in_itemsize, out_itemsize, vmem_budget):
    """Largest sublane-aligned row tile whose live VMEM (double-buffered input
    + double-buffered output + f32 temporaries) fits the given budget."""
    # Per tile row: 2x double-buffered input + 2x double-buffered output
    # + ~4 f32-wide temporaries inside the kernel body.
    bytes_per_row = d_pad * (2 * in_itemsize + 2 * out_itemsize + 4 * 4)
    tb = vmem_budget // max(bytes_per_row, 1)
    tb = int(max(_SUBLANE, min(tb, 8192)))
    tb = (tb // _SUBLANE) * _SUBLANE
    # Never tile larger than the (sublane-rounded) batch.
    tb = min(tb, _round_up(b, _SUBLANE))
    return tb


def layer_norm(x, gamma, beta, eps=0.001, block_rows=None):
    """LayerNorm over axis 1 of a (batch, dim) array, unbiased variance."""
    b, d = x.shape
    d_pad = _round_up(d, _LANE)

    # Cast params to f32 once in the wrapper (hot loop only multiplies).
    gamma2d = gamma.astype(jnp.float32).reshape(1, d)
    beta2d = beta.astype(jnp.float32).reshape(1, d)

    vmem_cap = _per_core_vmem_bytes()
    if block_rows is None:
        tb = _pick_block_rows(b, d_pad, x.dtype.itemsize, x.dtype.itemsize,
                              vmem_cap // 2)
    else:
        tb = max(_SUBLANE, min(int(block_rows), _round_up(b, _SUBLANE)))
        tb = (tb // _SUBLANE) * _SUBLANE

    # Balance the grid across v7x's 2 TensorCores: if we already have >= 2
    # steps, make the step count even (costs at most one extra tiny step on
    # single-TC chips; avoids a ~33% imbalance on v7x for odd step counts).
    steps = pl.cdiv(b, tb)
    if steps >= 2 and steps % 2 == 1:
        tb2 = _round_up(pl.cdiv(b, steps + 1), _SUBLANE)
        tb = max(_SUBLANE, tb2)
        steps = pl.cdiv(b, tb)

    grid = (steps,)  # ragged batch OK: edge-block writes are masked by Pallas

    kernel = functools.partial(_layernorm_kernel, dim=d, d_pad=d_pad, eps=eps)

    # NOTE: blocks are (tb, d_pad) over UNPADDED (b, d) arrays.  d_pad is a
    # multiple of 128 so in-VMEM tiles are lane-aligned; HBM traffic is only
    # the real bytes and Pallas masks the out-of-range lane stores.
    out = pl.pallas_call(
        kernel,
        out_shape=jax.ShapeDtypeStruct((b, d), x.dtype),
        grid_spec=pltpu.PrefetchScalarGridSpec(
            num_scalar_prefetch=0,
            grid=grid,
            in_specs=[
                pl.BlockSpec((tb, d_pad), lambda i: (i, 0)),
                pl.BlockSpec((1, d_pad), lambda i: (0, 0)),
                pl.BlockSpec((1, d_pad), lambda i: (0, 0)),
            ],
            out_specs=pl.BlockSpec((tb, d_pad), lambda i: (i, 0)),
        ),
        compiler_params=pltpu.CompilerParams(
            dimension_semantics=("parallel",),
            vmem_limit_bytes=int(min(vmem_cap * 3 // 4, 100 << 20)),
        ),
    )(x, gamma2d, beta2d)

    return out


def layer_norm_ref(x, gamma, beta, eps=0.001):
    # Pure-JAX reference mirroring the PyTorch forward (unbiased variance).
    x32 = x.astype(jnp.float32)
    mean = jnp.mean(x32, axis=1, keepdims=True)
    var = jnp.var(x32, axis=1, keepdims=True, ddof=1)
    x_hat = (x32 - mean) / jnp.sqrt(var + eps)
    g = gamma.astype(jnp.float32)[None, :]
    bta = beta.astype(jnp.float32)[None, :]
    return (g * x_hat + bta).astype(x.dtype)


if __name__ == "__main__":
    key = jax.random.PRNGKey(0)

    # Case 1: the module's small demo shape (dim < 128 -> masked lane path,
    # no wrapper padding).
    batch, dim = 8, 32
    x = jax.random.normal(key, (batch, dim), dtype=jnp.float32)
    gamma = jnp.ones((dim,), dtype=jnp.float32)   # matches module __init__
    beta = jnp.zeros((dim,), dtype=jnp.float32)

    out = jax.block_until_ready(layer_norm(x, gamma, beta, eps=0.001))
    ref = layer_norm_ref(x, gamma, beta, eps=0.001)
    assert out.shape == (batch, dim)
    assert jnp.allclose(out, ref, atol=1e-5, rtol=1e-5), "mismatch (dim=32)"

    # Case 2: lane-dense feature dim (multiple of 128) + ragged batch.
    key2 = jax.random.PRNGKey(0)
    batch2, dim2 = 12, 128
    x2 = jax.random.normal(key2, (batch2, dim2), dtype=jnp.float32)
    gamma2 = jnp.ones((dim2,), dtype=jnp.float32)
    beta2 = jnp.zeros((dim2,), dtype=jnp.float32)

    out2 = jax.block_until_ready(layer_norm(x2, gamma2, beta2, eps=0.001))
    ref2 = layer_norm_ref(x2, gamma2, beta2, eps=0.001)
    assert out2.shape == (batch2, dim2)
    assert jnp.allclose(out2, ref2, atol=1e-5, rtol=1e-5), "mismatch (dim=128)"

    print("KERNEL_OK")
</pallas_src>

<mosaic_0001>
module attributes {stable_mosaic.version = 11 : i64} {
  func.func @_layernorm_kernel(%arg0: i32, %arg1: memref<8x128xf32, #tpu.memory_space<vmem>>, %arg2: memref<1x128xf32, #tpu.memory_space<vmem>>, %arg3: memref<1x128xf32, #tpu.memory_space<vmem>>, %arg4: memref<8x128xf32, #tpu.memory_space<vmem>>) attributes {dimension_semantics = [#tpu.dimension_semantics<parallel>], iteration_bounds = array<i64: 1>, scalar_prefetch = 0 : i64, scratch_operands = 0 : i64, tpu.core_type = #tpu.core_type<tc>, window_params = [{transform_indices = @transform_0, window_bounds = array<i64: 8, 128>}, {transform_indices = @transform_1, window_bounds = array<i64: 1, 128>}, {transform_indices = @transform_2, window_bounds = array<i64: 1, 128>}, {transform_indices = @transform_3, window_bounds = array<i64: 8, 128>}]} {
    %c0 = arith.constant 0 : index
    %c0_0 = arith.constant 0 : index
    %0 = vector.load %arg1[%c0, %c0_0] : memref<8x128xf32, #tpu.memory_space<vmem>>, vector<8x128xf32>
    %1 = tpu.iota {dimensions = array<i32: 1>} : vector<8x128xi32>
    %c32_i32 = arith.constant 32 : i32
    %2 = vector.broadcast %c32_i32 : i32 to vector<8x128xi32>
    %3 = arith.cmpi slt, %1, %2 : vector<8x128xi32>
    %cst = arith.constant 0.000000e+00 : f32
    %4 = vector.broadcast %cst : f32 to vector<8x128xf32>
    %5 = arith.select %3, %0, %4 : vector<8x128xi1>, vector<8x128xf32>
    %cst_1 = arith.constant dense<0.000000e+00> : vector<8xf32>
    %6 = vector.multi_reduction <add>, %5, %cst_1 [1] : vector<8x128xf32> to vector<8xf32>
    %7 = vector.shape_cast %6 : vector<8xf32> to vector<8x1xf32>
    %cst_2 = arith.constant 3.125000e-02 : f32
    %8 = vector.broadcast %cst_2 : f32 to vector<8x1xf32>
    %9 = arith.mulf %7, %8 : vector<8x1xf32>
    %10 = vector.broadcast %9 : vector<8x1xf32> to vector<8x128xf32>
    %11 = arith.subf %0, %10 : vector<8x128xf32>
    %12 = arith.mulf %11, %11 : vector<8x128xf32>
    %cst_3 = arith.constant 0.000000e+00 : f32
    %13 = vector.broadcast %cst_3 : f32 to vector<8x128xf32>
    %14 = arith.select %3, %12, %13 : vector<8x128xi1>, vector<8x128xf32>
    %cst_4 = arith.constant dense<0.000000e+00> : vector<8xf32>
    %15 = vector.multi_reduction <add>, %14, %cst_4 [1] : vector<8x128xf32> to vector<8xf32>
    %16 = vector.shape_cast %15 : vector<8xf32> to vector<8x1xf32>
    %cst_5 = arith.constant 0.0322580636 : f32
    %17 = vector.broadcast %cst_5 : f32 to vector<8x1xf32>
    %18 = arith.mulf %16, %17 : vector<8x1xf32>
    %cst_6 = arith.constant 1.000000e-03 : f32
    %19 = vector.broadcast %cst_6 : f32 to vector<8x1xf32>
    %20 = arith.addf %18, %19 : vector<8x1xf32>
    %21 = math.rsqrt %20 : vector<8x1xf32>
    %22 = vector.broadcast %21 : vector<8x1xf32> to vector<8x128xf32>
    %23 = arith.mulf %11, %22 : vector<8x128xf32>
    %c0_7 = arith.constant 0 : index
    %c0_8 = arith.constant 0 : index
    %24 = vector.load %arg2[%c0_7, %c0_8] : memref<1x128xf32, #tpu.memory_space<vmem>>, vector<1x128xf32>
    %25 = vector.broadcast %24 : vector<1x128xf32> to vector<8x128xf32>
    %26 = arith.mulf %25, %23 : vector<8x128xf32>
    %c0_9 = arith.constant 0 : index
    %c0_10 = arith.constant 0 : index
    %27 = vector.load %arg3[%c0_9, %c0_10] : memref<1x128xf32, #tpu.memory_space<vmem>>, vector<1x128xf32>
    %28 = vector.broadcast %27 : vector<1x128xf32> to vector<8x128xf32>
    %29 = arith.addf %26, %28 : vector<8x128xf32>
    %c0_11 = arith.constant 0 : index
    %c0_12 = arith.constant 0 : index
    %30 = vector.load %arg4[%c0_11, %c0_12] : memref<8x128xf32, #tpu.memory_space<vmem>>, vector<8x128xf32>
    tpu.vector_store %arg4[%c0_11, %c0_12], %29 {strides = array<i32>} : memref<8x128xf32, #tpu.memory_space<vmem>>, vector<8x128xf32>,
    return
  }
  func.func @transform_0(%arg0: i32) -> (i32, i32) {
    %c0_i32 = arith.constant 0 : i32
    %c0_i32_0 = arith.constant 0 : i32
    return %arg0, %c0_i32 : i32, i32
  }
  func.func @transform_1(%arg0: i32) -> (i32, i32) {
    %c0_i32 = arith.constant 0 : i32
    %c0_i32_0 = arith.constant 0 : i32
    %c0_i32_1 = arith.constant 0 : i32
    return %c0_i32, %c0_i32_0 : i32, i32
  }
  func.func @transform_2(%arg0: i32) -> (i32, i32) {
    %c0_i32 = arith.constant 0 : i32
    %c0_i32_0 = arith.constant 0 : i32
    %c0_i32_1 = arith.constant 0 : i32
    return %c0_i32, %c0_i32_0 : i32, i32
  }
  func.func @transform_3(%arg0: i32) -> (i32, i32) {
    %c0_i32 = arith.constant 0 : i32
    %c0_i32_0 = arith.constant 0 : i32
    return %arg0, %c0_i32 : i32, i32
  }
}

</mosaic_0001>

<llo_original>
// kernel: tpu_custom_call.1
$region0: #{tpu_custom_call.1}
  #allocation0 [shape = 'u32[]', space=smem, size = 0x4, offset = 0x4, fixed_abs, tag = 'smem constant byte address 0x4 - core index']
  #allocation1 [shape = 'u32[144,128]{1,0:T(1,128)}', space=vmem, size = 0x12000, scoped, tag = 'internal scratch']
  %s0 = inlined_call_operand.hbm [shape: f32[8,32], index: 0, kind: input, shape index: {}]
  %s1 = inlined_call_operand.vmem [shape: f32[1,32], index: 1, kind: input, shape index: {}]
  %s2 = inlined_call_operand.vmem [shape: f32[1,32], index: 2, kind: input, shape index: {}]
  %s3 = inlined_call_operand.hbm [shape: f32[8,32], index: 3, kind: output, shape index: {}]
  %s4 = sld [smem:[#allocation0]]
  $region26: #{tpu_custom_call.1} parent=0
    _
  %s6 = ssub.s32 1, %s4
  %s7 = scalar_select 0, %s6, %s4
  $region1: #{tpu_custom_call.1} parent=0
    #allocation2 [shape = 'u8[4096]{0}', space=vmem, size = 0x1000, scoped, tag = 'input window, operand 0, single buffered']
    #allocation3 [shape = 's32[1]{0}', space=sflag, size = 0x4, scoped, tag = 'scoped memory for tpu_custom_call.1']
    #allocation4 [shape = 's32[1]{0}', space=sflag, size = 0x4, scoped, tag = 'scoped memory for tpu_custom_call.1']
    #allocation5 [shape = 'u8[4096]{0}', space=vmem, size = 0x1000, scoped, tag = 'output window, operand 0, single buffered']
    %8 = vsyncpa [#allocation3], 0
    %9 = vsyncpa [#allocation4], 0
    // Predicated region
    $region2: #{tpu_custom_call.1} parent=1 // pred_check
      _
    $region3: #{tpu_custom_call.1} parent=1 // pred_check_branch
      %11 = sbr.rel (0) target = $region5
    $region4: #{tpu_custom_call.1} parent=1 // pred_region
      %s13 = ssub.s32 128, 128
      %14 = vsyncadd [#allocation3], %s13
      %s16 = sshll.u32 [#allocation2], 4
      %s17 = int_to_ptr.vmem [resolvable:$true] %s16
      %19 = dma.hbm_to_vmem [thread:$0]  %s0, 128, %s17, [#allocation3]
    $region5: #{tpu_custom_call.1} parent=1 // pred_fallthru
      _
    // Predicated region
    $region6: #{tpu_custom_call.1} parent=1 // pred_check
      _
    $region7: #{tpu_custom_call.1} parent=1 // pred_check_branch
      %21 = sbr.rel (0) target = $region9
    $region8: #{tpu_custom_call.1} parent=1 // pred_region
      _
    $region9: #{tpu_custom_call.1} parent=1 // pred_fallthru
      _
    // Predicated region
    $region10: #{tpu_custom_call.1} parent=1 // pred_check
      _
    $region11: #{tpu_custom_call.1} parent=1 // pred_check_branch
      %23 = sbr.rel (0) target = $region13
    $region12: #{tpu_custom_call.1} parent=1 // pred_region
      _
    $region13: #{tpu_custom_call.1} parent=1 // pred_fallthru
      _
    // Predicated region
    $region14: #{tpu_custom_call.1} parent=1 // pred_check
      _
    $region15: #{tpu_custom_call.1} parent=1 // pred_check_branch
      %25 = sbr.rel (0) target = $region17
    $region16: #{tpu_custom_call.1} parent=1 // pred_region
      %26 = dma.done [#allocation3], 128
    $region17: #{tpu_custom_call.1} parent=1 // pred_fallthru
      _
    %v27 = vld [vmem:[#allocation2] sm:$0xff]
    %v28 = vlaneseq
    %v29 = vand.u32 %v28, 127
    %vm30 = vcmp.lt.s32.totalorder %v29, 32
    %v31 = vsel %vm30, %v27, 0.0
    %32 = vadd.xlane.f32.xlu0 %v31
    %v33 = vpop.xlane.xlu0 %32
    %v34 = vmul.f32 %v33, 0.03125
    %v35 = vsub.f32 %v27, %v34
    %v36 = vmul.f32 %v35, %v35
    %v37 = vsel %vm30, %v36, 0.0
    %38 = vadd.xlane.f32.xlu0 %v37
    %v39 = vpop.xlane.xlu0 %38
    %v40 = vmul.f32 %v39, 0.032258064
    %v41 = vadd.f32 %v40, 0.001
    %v42 = vrsqrt.pop %v41
    %v43 = vmul.f32 %v35, %v42
    %v44 = vld [vmem:[%s1] sm:$0x1]
    %v46 = vlaneseq
    %v47 = vshrl.u32 %v46, 7
    %v48 = vsub.s32 0, %v47
    %v49 = vrot.slane %v44, %v48
    %v51 = vmul.f32 %v49, %v43
    %v52 = vld [vmem:[%s2] sm:$0x1]
    %v54 = vlaneseq
    %v55 = vshrl.u32 %v54, 7
    %v56 = vsub.s32 0, %v55
    %v57 = vrot.slane %v52, %v56
    %v59 = vadd.f32 %v51, %v57
    %60 = vst [vmem:[#allocation5] sm:$0xff] %v59
    // Predicated region
    $region18: #{tpu_custom_call.1} parent=1 // pred_check
      _
    $region19: #{tpu_custom_call.1} parent=1 // pred_check_branch
      %62 = sbr.rel (0) target = $region21
    $region20: #{tpu_custom_call.1} parent=1 // pred_region
      %s64 = ssub.s32 128, 128
      %65 = vsyncadd [#allocation4], %s64
      %s67 = sshll.u32 [#allocation5], 4
      %s68 = int_to_ptr.vmem [resolvable:$true] %s67
      %70 = dma.vmem_to_hbm [thread:$0]  %s68, 128, %s3, [#allocation4]
    $region21: #{tpu_custom_call.1} parent=1 // pred_fallthru
      _
    // Predicated region
    $region22: #{tpu_custom_call.1} parent=1 // pred_check
      _
    $region23: #{tpu_custom_call.1} parent=1 // pred_check_branch
      %72 = sbr.rel (0) target = $region25
    $region24: #{tpu_custom_call.1} parent=1 // pred_region
      %73 = dma.done [#allocation4], 128
    $region25: #{tpu_custom_call.1} parent=1 // pred_fallthru
      _
    %74 = vsyncpa [#allocation3], 1
    %75 = vsyncpa [#allocation4], 1

</llo_original>
